<compile_context>
chip_gen: v5e
topology: v5e:2x2
jax: 0.10.0
libtpu: 0.0.40
codegen_flags: <defaults>
</compile_context>

<pallas_src>
import math

import jax
import jax.numpy as jnp
from jax.experimental import pallas as pl
from jax.experimental.pallas import tpu as pltpu

LANE = 128  # TPU lane width; pad hidden/output feature dims to this.


def _round_up(x, m):
    return ((x + m - 1) // m) * m


# ---------------------------------------------------------------------------
# Kernel: one batch tile, all (padded) weights resident in VMEM.
# ---------------------------------------------------------------------------
def _dqn_kernel(x_ref, w1_ref, b1_ref, w2_ref, b2_ref, w3_ref, b3_ref, o_ref):
    cdt = w1_ref.dtype  # compute dtype for MXU operands (bf16 on v6e/v7x)

    # fc1 + ReLU (f32 accumulate, f32 epilogue)
    h = jnp.dot(x_ref[...], w1_ref[...], preferred_element_type=jnp.float32)
    h = jnp.maximum(h + b1_ref[...], 0.0)

    # fc2 + ReLU
    h = jnp.dot(h.astype(cdt), w2_ref[...], preferred_element_type=jnp.float32)
    h = jnp.maximum(h + b2_ref[...], 0.0)

    # fc3 (no activation); lane-dense store
    out = jnp.dot(h.astype(cdt), w3_ref[...], preferred_element_type=jnp.float32)
    o_ref[...] = (out + b3_ref[...]).astype(o_ref.dtype)


# ---------------------------------------------------------------------------
# Parameter prep: pad lane dims to 128, cast weights to compute dtype.
# Padding weights/biases are exactly zero, so padded hidden lanes stay 0
# through ReLU and padded output lanes are 0 (sliced off before returning).
# ---------------------------------------------------------------------------
def prepare_params(params, compute_dtype=jnp.bfloat16, pad=LANE):
    (w1, b1), (w2, b2), (w3, b3) = params
    in_dim, hid = w1.shape
    out_dim = w3.shape[1]
    hid_p = _round_up(hid, pad)
    out_p = _round_up(out_dim, pad)

    w1p = jnp.zeros((in_dim, hid_p), compute_dtype).at[:, :hid].set(w1.astype(compute_dtype))
    b1p = jnp.zeros((1, hid_p), jnp.float32).at[:, :hid].set(b1)
    w2p = jnp.zeros((hid_p, hid_p), compute_dtype).at[:hid, :hid].set(w2.astype(compute_dtype))
    b2p = jnp.zeros((1, hid_p), jnp.float32).at[:, :hid].set(b2)
    w3p = jnp.zeros((hid_p, out_p), compute_dtype).at[:hid, :out_dim].set(w3.astype(compute_dtype))
    b3p = jnp.zeros((1, out_p), jnp.float32).at[:, :out_dim].set(b3)
    return (w1p, b1p, w2p, b2p, w3p, b3p), out_dim


# ---------------------------------------------------------------------------
# Wrapper: batch tiling + lane-dense output, sliced back to (B, out_dim).
# ---------------------------------------------------------------------------
def dqn_forward(x, padded_params, out_dim, *, tile_b=512):
    w1, b1, w2, b2, w3, b3 = padded_params
    batch, in_dim = x.shape
    hid_p = w1.shape[1]
    out_p = w3.shape[1]
    compute_dtype = w1.dtype

    # Tile sizing: multiple of 8 sublanes; pad batch to a whole number of tiles.
    tile_b = min(tile_b, _round_up(batch, 8))
    b_pad = _round_up(batch, tile_b)

    xp = x.astype(compute_dtype)
    if b_pad != batch:
        xp = jnp.pad(xp, ((0, b_pad - batch), (0, 0)))

    grid = (b_pad // tile_b,)

    flops = 2 * b_pad * (in_dim * hid_p + hid_p * hid_p + hid_p * out_p)
    bytes_accessed = (
        xp.size * xp.dtype.itemsize
        + b_pad * out_p * 4
        + sum(a.size * a.dtype.itemsize for a in (w1, b1, w2, b2, w3, b3))
    )

    def weight_spec(shape):
        return pl.BlockSpec(shape, lambda i: (0, 0))  # VMEM-resident across grid

    out = pl.pallas_call(
        _dqn_kernel,
        out_shape=jax.ShapeDtypeStruct((b_pad, out_p), jnp.float32),
        grid=grid,
        in_specs=[
            pl.BlockSpec((tile_b, in_dim), lambda i: (i, 0)),
            weight_spec(w1.shape), weight_spec(b1.shape),
            weight_spec(w2.shape), weight_spec(b2.shape),
            weight_spec(w3.shape), weight_spec(b3.shape),
        ],
        out_specs=pl.BlockSpec((tile_b, out_p), lambda i: (i, 0)),
        compiler_params=pltpu.CompilerParams(
            dimension_semantics=("parallel",),
        ),
        cost_estimate=pl.CostEstimate(
            flops=flops, transcendentals=0, bytes_accessed=bytes_accessed
        ),
    )(xp, w1, b1, w2, b2, w3, b3)

    # Slice back to real batch and real Q-value width (drop zero-padded lanes).
    return out[:batch, :out_dim].astype(x.dtype)


# ---------------------------------------------------------------------------
# Init mimicking nn.Linear's U(-1/sqrt(fan_in), 1/sqrt(fan_in)); weights are
# stored pre-transposed to (in_features, out_features).
# ---------------------------------------------------------------------------
def init_linear(key, fan_in, fan_out):
    kw, kb = jax.random.split(key)
    bound = 1.0 / math.sqrt(fan_in)
    w = jax.random.uniform(kw, (fan_in, fan_out), jnp.float32, -bound, bound)
    b = jax.random.uniform(kb, (fan_out,), jnp.float32, -bound, bound)
    return w, b


def init_dqn_params(key, input_dim, output_dim, hidden=64):
    k1, k2, k3 = jax.random.split(key, 3)
    return (
        init_linear(k1, input_dim, hidden),
        init_linear(k2, hidden, hidden),
        init_linear(k3, hidden, output_dim),
    )


def ref_forward(x, params, compute_dtype):
    """Plain-JAX reference matching the kernel's numerics (bf16 operands,
    f32 accumulation, f32 epilogue)."""
    (w1, b1), (w2, b2), (w3, b3) = params
    c = lambda a: a.astype(compute_dtype).astype(jnp.float32)
    h = jnp.maximum(c(x) @ c(w1) + b1, 0.0)
    h = jnp.maximum(c(h) @ c(w2) + b2, 0.0)
    return c(h) @ c(w3) + b3


if __name__ == "__main__":
    key = jax.random.PRNGKey(0)
    k_params, k_x = jax.random.split(key)

    # NOTE: real DQN callers should batch states so B is >= a few hundred rows
    # per call; at tiny batches launch overhead dominates on every TPU gen.
    batch, input_dim, output_dim = 8, 16, 4
    params = init_dqn_params(k_params, input_dim, output_dim)
    x = jax.random.normal(k_x, (batch, input_dim), jnp.float32)

    compute_dtype = jnp.bfloat16
    padded, out_dim = prepare_params(params, compute_dtype=compute_dtype)

    out = dqn_forward(x, padded, out_dim, tile_b=512)
    jax.block_until_ready(out)

    ref = ref_forward(x, params, compute_dtype)
    assert out.shape == (batch, output_dim)
    assert jnp.allclose(out, ref, atol=1e-3, rtol=1e-3), (
        f"max abs err {jnp.max(jnp.abs(out - ref))}"
    )

    print("KERNEL_OK")
</pallas_src>

<mosaic_0001>
module attributes {stable_mosaic.version = 11 : i64} {
  func.func @_dqn_kernel(%arg0: i32, %arg1: memref<8x16xbf16, #tpu.memory_space<vmem>>, %arg2: memref<16x128xbf16, #tpu.memory_space<vmem>>, %arg3: memref<1x128xf32, #tpu.memory_space<vmem>>, %arg4: memref<128x128xbf16, #tpu.memory_space<vmem>>, %arg5: memref<1x128xf32, #tpu.memory_space<vmem>>, %arg6: memref<128x128xbf16, #tpu.memory_space<vmem>>, %arg7: memref<1x128xf32, #tpu.memory_space<vmem>>, %arg8: memref<8x128xf32, #tpu.memory_space<vmem>>) attributes {dimension_semantics = [#tpu.dimension_semantics<parallel>], iteration_bounds = array<i64: 1>, scalar_prefetch = 0 : i64, scratch_operands = 0 : i64, tpu.core_type = #tpu.core_type<tc>, window_params = [{transform_indices = @transform_0, window_bounds = array<i64: 8, 16>}, {pipeline_mode = #tpu.pipeline_mode<synchronous>, transform_indices = @transform_1, window_bounds = array<i64: 16, 128>}, {pipeline_mode = #tpu.pipeline_mode<synchronous>, transform_indices = @transform_2, window_bounds = array<i64: 1, 128>}, {pipeline_mode = #tpu.pipeline_mode<synchronous>, transform_indices = @transform_3, window_bounds = array<i64: 128, 128>}, {pipeline_mode = #tpu.pipeline_mode<synchronous>, transform_indices = @transform_4, window_bounds = array<i64: 1, 128>}, {pipeline_mode = #tpu.pipeline_mode<synchronous>, transform_indices = @transform_5, window_bounds = array<i64: 128, 128>}, {pipeline_mode = #tpu.pipeline_mode<synchronous>, transform_indices = @transform_6, window_bounds = array<i64: 1, 128>}, {transform_indices = @transform_7, window_bounds = array<i64: 8, 128>}]} {
    %c0 = arith.constant 0 : index
    %c0_0 = arith.constant 0 : index
    %0 = vector.load %arg1[%c0, %c0_0] : memref<8x16xbf16, #tpu.memory_space<vmem>>, vector<8x16xbf16>
    %c0_1 = arith.constant 0 : index
    %c0_2 = arith.constant 0 : index
    %1 = vector.load %arg2[%c0_1, %c0_2] : memref<16x128xbf16, #tpu.memory_space<vmem>>, vector<16x128xbf16>
    %cst = arith.constant dense<0.000000e+00> : vector<8x128xf32>
    %2 = tpu.matmul %0, %1, %cst {dimension_numbers = #tpu.dot_dimension_numbers<[1], [0], [0], [1], [0, 0, 1, 1], [], []>} : vector<8x16xbf16>, vector<16x128xbf16>, vector<8x128xf32> -> vector<8x128xf32>
    %c0_3 = arith.constant 0 : index
    %c0_4 = arith.constant 0 : index
    %3 = vector.load %arg3[%c0_3, %c0_4] : memref<1x128xf32, #tpu.memory_space<vmem>>, vector<1x128xf32>
    %4 = vector.broadcast %3 : vector<1x128xf32> to vector<8x128xf32>
    %5 = arith.addf %2, %4 : vector<8x128xf32>
    %cst_5 = arith.constant 0.000000e+00 : f32
    %6 = vector.broadcast %cst_5 : f32 to vector<8x128xf32>
    %7 = arith.maximumf %5, %6 : vector<8x128xf32>
    %8 = arith.truncf %7 : vector<8x128xf32> to vector<8x128xbf16>
    %c0_6 = arith.constant 0 : index
    %c0_7 = arith.constant 0 : index
    %9 = vector.load %arg4[%c0_6, %c0_7] : memref<128x128xbf16, #tpu.memory_space<vmem>>, vector<128x128xbf16>
    %cst_8 = arith.constant dense<0.000000e+00> : vector<8x128xf32>
    %10 = tpu.matmul %8, %9, %cst_8 {dimension_numbers = #tpu.dot_dimension_numbers<[1], [0], [0], [1], [0, 0, 1, 1], [], []>} : vector<8x128xbf16>, vector<128x128xbf16>, vector<8x128xf32> -> vector<8x128xf32>
    %c0_9 = arith.constant 0 : index
    %c0_10 = arith.constant 0 : index
    %11 = vector.load %arg5[%c0_9, %c0_10] : memref<1x128xf32, #tpu.memory_space<vmem>>, vector<1x128xf32>
    %12 = vector.broadcast %11 : vector<1x128xf32> to vector<8x128xf32>
    %13 = arith.addf %10, %12 : vector<8x128xf32>
    %cst_11 = arith.constant 0.000000e+00 : f32
    %14 = vector.broadcast %cst_11 : f32 to vector<8x128xf32>
    %15 = arith.maximumf %13, %14 : vector<8x128xf32>
    %16 = arith.truncf %15 : vector<8x128xf32> to vector<8x128xbf16>
    %c0_12 = arith.constant 0 : index
    %c0_13 = arith.constant 0 : index
    %17 = vector.load %arg6[%c0_12, %c0_13] : memref<128x128xbf16, #tpu.memory_space<vmem>>, vector<128x128xbf16>
    %cst_14 = arith.constant dense<0.000000e+00> : vector<8x128xf32>
    %18 = tpu.matmul %16, %17, %cst_14 {dimension_numbers = #tpu.dot_dimension_numbers<[1], [0], [0], [1], [0, 0, 1, 1], [], []>} : vector<8x128xbf16>, vector<128x128xbf16>, vector<8x128xf32> -> vector<8x128xf32>
    %c0_15 = arith.constant 0 : index
    %c0_16 = arith.constant 0 : index
    %19 = vector.load %arg7[%c0_15, %c0_16] : memref<1x128xf32, #tpu.memory_space<vmem>>, vector<1x128xf32>
    %20 = vector.broadcast %19 : vector<1x128xf32> to vector<8x128xf32>
    %21 = arith.addf %18, %20 : vector<8x128xf32>
    %c0_17 = arith.constant 0 : index
    %c0_18 = arith.constant 0 : index
    %22 = vector.load %arg8[%c0_17, %c0_18] : memref<8x128xf32, #tpu.memory_space<vmem>>, vector<8x128xf32>
    tpu.vector_store %arg8[%c0_17, %c0_18], %21 {strides = array<i32>} : memref<8x128xf32, #tpu.memory_space<vmem>>, vector<8x128xf32>,
    return
  }
  func.func @transform_0(%arg0: i32) -> (i32, i32) {
    %c0_i32 = arith.constant 0 : i32
    %c0_i32_0 = arith.constant 0 : i32
    return %arg0, %c0_i32 : i32, i32
  }
  func.func @transform_1(%arg0: i32) -> (i32, i32) {
    %c0_i32 = arith.constant 0 : i32
    %c0_i32_0 = arith.constant 0 : i32
    %c0_i32_1 = arith.constant 0 : i32
    return %c0_i32, %c0_i32_0 : i32, i32
  }
  func.func @transform_2(%arg0: i32) -> (i32, i32) {
    %c0_i32 = arith.constant 0 : i32
    %c0_i32_0 = arith.constant 0 : i32
    %c0_i32_1 = arith.constant 0 : i32
    return %c0_i32, %c0_i32_0 : i32, i32
  }
  func.func @transform_3(%arg0: i32) -> (i32, i32) {
    %c0_i32 = arith.constant 0 : i32
    %c0_i32_0 = arith.constant 0 : i32
    %c0_i32_1 = arith.constant 0 : i32
    return %c0_i32, %c0_i32_0 : i32, i32
  }
  func.func @transform_4(%arg0: i32) -> (i32, i32) {
    %c0_i32 = arith.constant 0 : i32
    %c0_i32_0 = arith.constant 0 : i32
    %c0_i32_1 = arith.constant 0 : i32
    return %c0_i32, %c0_i32_0 : i32, i32
  }
  func.func @transform_5(%arg0: i32) -> (i32, i32) {
    %c0_i32 = arith.constant 0 : i32
    %c0_i32_0 = arith.constant 0 : i32
    %c0_i32_1 = arith.constant 0 : i32
    return %c0_i32, %c0_i32_0 : i32, i32
  }
  func.func @transform_6(%arg0: i32) -> (i32, i32) {
    %c0_i32 = arith.constant 0 : i32
    %c0_i32_0 = arith.constant 0 : i32
    %c0_i32_1 = arith.constant 0 : i32
    return %c0_i32, %c0_i32_0 : i32, i32
  }
  func.func @transform_7(%arg0: i32) -> (i32, i32) {
    %c0_i32 = arith.constant 0 : i32
    %c0_i32_0 = arith.constant 0 : i32
    return %arg0, %c0_i32 : i32, i32
  }
}

</mosaic_0001>

<llo_original>
// kernel: tpu_custom_call.1
$region0: #{tpu_custom_call.1}
  #allocation0 [shape = 'u32[]', space=smem, size = 0x4, offset = 0x4, fixed_abs, tag = 'smem constant byte address 0x4 - core index']
  #allocation1 [shape = 'u32[72,128]{1,0:T(1,128)}', space=vmem, size = 0x9000, scoped, tag = 'internal scratch']
  %s0 = inlined_call_operand.hbm [shape: bf16[8,16], index: 0, kind: input, shape index: {}]
  %s1 = inlined_call_operand.hbm [shape: bf16[16,128], index: 1, kind: input, shape index: {}]
  %s2 = inlined_call_operand.vmem [shape: f32[1,128], index: 2, kind: input, shape index: {}]
  %s3 = inlined_call_operand.hbm [shape: bf16[128,128], index: 3, kind: input, shape index: {}]
  %s4 = inlined_call_operand.vmem [shape: f32[1,128], index: 4, kind: input, shape index: {}]
  %s5 = inlined_call_operand.hbm [shape: bf16[128,128], index: 5, kind: input, shape index: {}]
  %s6 = inlined_call_operand.vmem [shape: f32[1,128], index: 6, kind: input, shape index: {}]
  %s7 = inlined_call_operand.hbm [shape: f32[8,128], index: 7, kind: output, shape index: {}]
  %s8 = sld [smem:[#allocation0]]
  $region54: #{tpu_custom_call.1} parent=0
    _
  %s10 = ssub.s32 1, %s8
  %s11 = scalar_select 0, %s10, %s8
  $region1: #{tpu_custom_call.1} parent=0
    #allocation2 [shape = 'u8[2048]{0}', space=vmem, size = 0x800, scoped, tag = 'input window, operand 0, single buffered']
    #allocation3 [shape = 's32[1]{0}', space=sflag, size = 0x4, scoped, tag = 'scoped memory for tpu_custom_call.1']
    #allocation4 [shape = 's32[1]{0}', space=sflag, size = 0x4, scoped, tag = 'scoped memory for tpu_custom_call.1']
    #allocation5 [shape = 'u8[4096]{0}', space=vmem, size = 0x1000, scoped, tag = 'input window, operand 1, single buffered']
    #allocation6 [shape = 's32[1]{0}', space=sflag, size = 0x4, scoped, tag = 'scoped memory for tpu_custom_call.1']
    #allocation7 [shape = 'u8[32768]{0}', space=vmem, size = 0x8000, scoped, tag = 'input window, operand 3, single buffered']
    #allocation8 [shape = 'u8[32768]{0}', space=vmem, size = 0x8000, scoped, tag = 'input window, operand 5, single buffered']
    #allocation9 [shape = 's32[1]{0}', space=sflag, size = 0x4, scoped, tag = 'scoped memory for tpu_custom_call.1']
    #allocation10 [shape = 'u8[4096]{0}', space=vmem, size = 0x1000, scoped, tag = 'output window, operand 0, single buffered']
    %12 = vsyncpa [#allocation3], 0
    %13 = vsyncpa [#allocation6], 0
    %14 = vsyncpa [#allocation9], 0
    %15 = vsyncpa [#allocation4], 0
    // Predicated region
    $region2: #{tpu_custom_call.1} parent=1 // pred_check
      _
    $region3: #{tpu_custom_call.1} parent=1 // pred_check_branch
      %17 = sbr.rel (0) target = $region5
    $region4: #{tpu_custom_call.1} parent=1 // pred_region
      %19 = vsyncadd [#allocation3], 0
      %s21 = sshll.u32 %s0, 4
      %s22 = int_to_ptr.hbm [resolvable:$true] %s21
      %s23 = sshll.u32 [#allocation2], 4
      %s24 = int_to_ptr.vmem [resolvable:$true] %s23
      %26 = dma.hbm_to_vmem [thread:$0]  %s22, 64, %s24, [#allocation3]
    $region5: #{tpu_custom_call.1} parent=1 // pred_fallthru
      _
    // Predicated region
    $region6: #{tpu_custom_call.1} parent=1 // pred_check
      _
    $region7: #{tpu_custom_call.1} parent=1 // pred_check_branch
      %28 = sbr.rel (0) target = $region9
    $region8: #{tpu_custom_call.1} parent=1 // pred_region
      %30 = vsyncadd [#allocation6], 0
      %s31 = sshll.u32 %s1, 4
      %s32 = int_to_ptr.hbm [resolvable:$true] %s31
      %s33 = sshll.u32 [#allocation5], 4
      %s34 = int_to_ptr.vmem [resolvable:$true] %s33
      %39 = dma.hbm_to_vmem [thread:$0]  %s32, 128, %s34, [#allocation6], 64, 64, 4
    $region9: #{tpu_custom_call.1} parent=1 // pred_fallthru
      _
    // Predicated region
    $region10: #{tpu_custom_call.1} parent=1 // pred_check
      _
    $region11: #{tpu_custom_call.1} parent=1 // pred_check_branch
      %41 = sbr.rel (0) target = $region13
    $region12: #{tpu_custom_call.1} parent=1 // pred_region
      _
    $region13: #{tpu_custom_call.1} parent=1 // pred_fallthru
      _
    // Predicated region
    $region14: #{tpu_custom_call.1} parent=1 // pred_check
      _
    $region15: #{tpu_custom_call.1} parent=1 // pred_check_branch
      %43 = sbr.rel (0) target = $region17
    $region16: #{tpu_custom_call.1} parent=1 // pred_region
      %45 = vsyncadd [#allocation6], 0
      %s46 = sshll.u32 %s3, 4
      %s47 = int_to_ptr.hbm [resolvable:$true] %s46
      %s48 = sshll.u32 [#allocation7], 4
      %s49 = int_to_ptr.vmem [resolvable:$true] %s48
      %54 = dma.hbm_to_vmem [thread:$0]  %s47, 1024, %s49, [#allocation6], 64, 64, 4
    $region17: #{tpu_custom_call.1} parent=1 // pred_fallthru
      _
    // Predicated region
    $region18: #{tpu_custom_call.1} parent=1 // pred_check
      _
    $region19: #{tpu_custom_call.1} parent=1 // pred_check_branch
      %56 = sbr.rel (0) target = $region21
    $region20: #{tpu_custom_call.1} parent=1 // pred_region
      _
    $region21: #{tpu_custom_call.1} parent=1 // pred_fallthru
      _
    // Predicated region
    $region22: #{tpu_custom_call.1} parent=1 // pred_check
      _
    $region23: #{tpu_custom_call.1} parent=1 // pred_check_branch
      %58 = sbr.rel (0) target = $region25
    $region24: #{tpu_custom_call.1} parent=1 // pred_region
      %60 = vsyncadd [#allocation9], 0
      %s61 = sshll.u32 %s5, 4
      %s62 = int_to_ptr.hbm [resolvable:$true] %s61
      %s63 = sshll.u32 [#allocation8], 4
      %s64 = int_to_ptr.vmem [resolvable:$true] %s63
      %69 = dma.hbm_to_vmem [thread:$0]  %s62, 1024, %s64, [#allocation9], 64, 64, 4
    $region25: #{tpu_custom_call.1} parent=1 // pred_fallthru
      _
    // Predicated region
    $region26: #{tpu_custom_call.1} parent=1 // pred_check
      _
    $region27: #{tpu_custom_call.1} parent=1 // pred_check_branch
      %71 = sbr.rel (0) target = $region29
    $region28: #{tpu_custom_call.1} parent=1 // pred_region
      _
    $region29: #{tpu_custom_call.1} parent=1 // pred_fallthru
      _
    // Predicated region
    $region30: #{tpu_custom_call.1} parent=1 // pred_check
      _
    $region31: #{tpu_custom_call.1} parent=1 // pred_check_branch
      %73 = sbr.rel (0) target = $region33
    $region32: #{tpu_custom_call.1} parent=1 // pred_region
      %75 = dma.done [#allocation3], 64
    $region33: #{tpu_custom_call.1} parent=1 // pred_fallthru
      _
    // Predicated region
    $region34: #{tpu_custom_call.1} parent=1 // pred_check
      _
    $region35: #{tpu_custom_call.1} parent=1 // pred_check_branch
      %77 = sbr.rel (0) target = $region37
    $region36: #{tpu_custom_call.1} parent=1 // pred_region
      %79 = dma.done [#allocation6], 128
    $region37: #{tpu_custom_call.1} parent=1 // pred_fallthru
      _
    // Predicated region
    $region38: #{tpu_custom_call.1} parent=1 // pred_check
      _
    $region39: #{tpu_custom_call.1} parent=1 // pred_check_branch
      %81 = sbr.rel (0) target = $region41
    $region40: #{tpu_custom_call.1} parent=1 // pred_region
      %83 = dma.done [#allocation6], 1024
    $region41: #{tpu_custom_call.1} parent=1 // pred_fallthru
      _
    // Predicated region
    $region42: #{tpu_custom_call.1} parent=1 // pred_check
      _
    $region43: #{tpu_custom_call.1} parent=1 // pred_check_branch
      %85 = sbr.rel (0) target = $region45
    $region44: #{tpu_custom_call.1} parent=1 // pred_region
      %87 = dma.done [#allocation9], 1024
    $region45: #{tpu_custom_call.1} parent=1 // pred_fallthru
      _
    %v89 = vld [vmem:[#allocation2] sm:$0xf]
    %v90 = vld [vmem:[#allocation5] sm:$0xf]
    %v91 = vld [vmem:[#allocation5 + $0x4] sm:$0xf]
    %v92 = vld [vmem:[%s2] sm:$0x1]
    %v94 = vperm.slane %v92, 0
    %v98 = vunpack.c.l.b16 %v90
    %v99 = vunpack.c.l.b16 %v91
    %v100 = vpack.c.b16 %v99, %v98
    %vm102 = vcmask 130048
    %v104 = vsel %vm102, %v89, 0
    %106 = vmatpush.bf16.msra.mxu0 0
    %107 = vmatpush.bf16.msra.mxu0 0
    %108 = vmatpush.bf16.msra.mxu0 0
    %109 = vmatpush.bf16.msra.mxu0 0
    %110 = vmatpush.bf16.msra.mxu0 0
    %111 = vmatpush.bf16.msra.mxu0 0
    %112 = vmatpush.bf16.msra.mxu0 0
    %113 = vmatpush.bf16.msra.mxu0 %v100
    %114 = vmatmul.bf16.gmra.mxu0 %v104
    %v115 = vpop.f32.mrf.mxu0
    %v116 = vadd.f32 %v94, %v115
    %v117 = vpop.f32.mrf.mxu0
    %118 = vdwg.mxu0
    %v119 = vmax.f32 %v116, 0.0
    %v120 = vpack.c.bf16 %v119, %v119
    %v121 = vld [vmem:[#allocation7] sm:$0xf]
    %v122 = vld [vmem:[#allocation7 + $0x4] sm:$0xf]
    %v123 = vld [vmem:[#allocation7 + $0x8] sm:$0xf]
    %v124 = vld [vmem:[#allocation7 + $0xc] sm:$0xf]
    %v125 = vld [vmem:[#allocation7 + $0x10] sm:$0xf]
    %v126 = vld [vmem:[#allocation7 + $0x14] sm:$0xf]
    %v127 = vld [vmem:[#allocation7 + $0x18] sm:$0xf]
    %v128 = vld [vmem:[#allocation7 + $0x1c] sm:$0xf]
    %v129 = vld [vmem:[#allocation7 + $0x20] sm:$0xf]
    %v130 = vld [vmem:[#allocation7 + $0x24] sm:$0xf]
    %v131 = vld [vmem:[#allocation7 + $0x28] sm:$0xf]
    %v132 = vld [vmem:[#allocation7 + $0x2c] sm:$0xf]
    %v133 = vld [vmem:[#allocation7 + $0x30] sm:$0xf]
    %v134 = vld [vmem:[#allocation7 + $0x34] sm:$0xf]
    %v135 = vld [vmem:[#allocation7 + $0x38] sm:$0xf]
    %v136 = vld [vmem:[#allocation7 + $0x3c] sm:$0xf]
    %v137 = vld [vmem:[%s4] sm:$0x1]
    %v139 = vperm.slane %v137, 0
    %v157 = vunpack.c.l.b16 %v121
    %v158 = vunpack.c.l.b16 %v122
    %v159 = vunpack.c.l.b16 %v123
    %v160 = vunpack.c.l.b16 %v124
    %v161 = vunpack.c.l.b16 %v125
    %v162 = vunpack.c.l.b16 %v126
    %v163 = vunpack.c.l.b16 %v127
    %v164 = vunpack.c.l.b16 %v128
    %v165 = vunpack.c.l.b16 %v129
    %v166 = vunpack.c.l.b16 %v130
    %v167 = vunpack.c.l.b16 %v131
    %v168 = vunpack.c.l.b16 %v132
    %v169 = vunpack.c.l.b16 %v133
    %v170 = vunpack.c.l.b16 %v134
    %v171 = vunpack.c.l.b16 %v135
    %v172 = vunpack.c.l.b16 %v136
    %v173 = vpack.c.b16 %v158, %v157
    %v174 = vpack.c.b16 %v160, %v159
    %v175 = vpack.c.b16 %v162, %v161
    %v176 = vpack.c.b16 %v164, %v163
    %v177 = vpack.c.b16 %v166, %v165
    %v178 = vpack.c.b16 %v168, %v167
    %v179 = vpack.c.b16 %v170, %v169
    %v180 = vpack.c.b16 %v172, %v171
    %189 = vmatpush.bf16.msra.mxu0 %v180
    %190 = vmatpush.bf16.msra.mxu0 %v179
    %191 = vmatpush.bf16.msra.mxu0 %v178
    %192 = vmatpush.bf16.msra.mxu0 %v177
    %193 = vmatpush.bf16.msra.mxu0 %v176
    %194 = vmatpush.bf16.msra.mxu0 %v175
    %195 = vmatpush.bf16.msra.mxu0 %v174
    %196 = vmatpush.bf16.msra.mxu0 %v173
    %197 = vmatmul.bf16.gmra.mxu0 %v120
    %v198 = vpop.f32.mrf.mxu0
    %v199 = vadd.f32 %v139, %v198
    %v200 = vpop.f32.mrf.mxu0
    %201 = vdwg.mxu0
    %v202 = vmax.f32 %v199, 0.0
    %v203 = vpack.c.bf16 %v202, %v202
    %v204 = vld [vmem:[#allocation8] sm:$0xf]
    %v205 = vld [vmem:[#allocation8 + $0x4] sm:$0xf]
    %v206 = vld [vmem:[#allocation8 + $0x8] sm:$0xf]
    %v207 = vld [vmem:[#allocation8 + $0xc] sm:$0xf]
    %v208 = vld [vmem:[#allocation8 + $0x10] sm:$0xf]
    %v209 = vld [vmem:[#allocation8 + $0x14] sm:$0xf]
    %v210 = vld [vmem:[#allocation8 + $0x18] sm:$0xf]
    %v211 = vld [vmem:[#allocation8 + $0x1c] sm:$0xf]
    %v212 = vld [vmem:[#allocation8 + $0x20] sm:$0xf]
    %v213 = vld [vmem:[#allocation8 + $0x24] sm:$0xf]
    %v214 = vld [vmem:[#allocation8 + $0x28] sm:$0xf]
    %v215 = vld [vmem:[#allocation8 + $0x2c] sm:$0xf]
    %v216 = vld [vmem:[#allocation8 + $0x30] sm:$0xf]
    %v217 = vld [vmem:[#allocation8 + $0x34] sm:$0xf]
    %v218 = vld [vmem:[#allocation8 + $0x38] sm:$0xf]
    %v219 = vld [vmem:[#allocation8 + $0x3c] sm:$0xf]
    %v220 = vld [vmem:[%s6] sm:$0x1]
    %v222 = vperm.slane %v220, 0
    %v240 = vunpack.c.l.b16 %v204
    %v241 = vunpack.c.l.b16 %v205
    %v242 = vunpack.c.l.b16 %v206
    %v243 = vunpack.c.l.b16 %v207
    %v244 = vunpack.c.l.b16 %v208
    %v245 = vunpack.c.l.b16 %v209
    %v246 = vunpack.c.l.b16 %v210
    %v247 = vunpack.c.l.b16 %v211
    %v248 = vunpack.c.l.b16 %v212
    %v249 = vunpack.c.l.b16 %v213
    %v250 = vunpack.c.l.b16 %v214
    %v251 = vunpack.c.l.b16 %v215
    %v252 = vunpack.c.l.b16 %v216
    %v253 = vunpack.c.l.b16 %v217
    %v254 = vunpack.c.l.b16 %v218
    %v255 = vunpack.c.l.b16 %v219
    %v256 = vpack.c.b16 %v241, %v240
    %v257 = vpack.c.b16 %v243, %v242
    %v258 = vpack.c.b16 %v245, %v244
    %v259 = vpack.c.b16 %v247, %v246
    %v260 = vpack.c.b16 %v249, %v248
    %v261 = vpack.c.b16 %v251, %v250
    %v262 = vpack.c.b16 %v253, %v252
    %v263 = vpack.c.b16 %v255, %v254
    %272 = vmatpush.bf16.msra.mxu0 %v263
    %273 = vmatpush.bf16.msra.mxu0 %v262
    %274 = vmatpush.bf16.msra.mxu0 %v261
    %275 = vmatpush.bf16.msra.mxu0 %v260
    %276 = vmatpush.bf16.msra.mxu0 %v259
    %277 = vmatpush.bf16.msra.mxu0 %v258
    %278 = vmatpush.bf16.msra.mxu0 %v257
    %279 = vmatpush.bf16.msra.mxu0 %v256
    %280 = vmatmul.bf16.gmra.mxu0 %v203
    %v281 = vpop.f32.mrf.mxu0
    %v282 = vadd.f32 %v222, %v281
    %v283 = vpop.f32.mrf.mxu0
    %284 = vdwg.mxu0
    %285 = vst [vmem:[#allocation10] sm:$0xff] %v282
    // Predicated region
    $region46: #{tpu_custom_call.1} parent=1 // pred_check
      _
    $region47: #{tpu_custom_call.1} parent=1 // pred_check_branch
      %287 = sbr.rel (0) target = $region49
    $region48: #{tpu_custom_call.1} parent=1 // pred_region
      %289 = vsyncadd [#allocation4], 0
      %s291 = sshll.u32 [#allocation10], 4
      %s292 = int_to_ptr.vmem [resolvable:$true] %s291
      %s293 = sshll.u32 %s7, 4
      %s294 = int_to_ptr.hbm [resolvable:$true] %s293
      %296 = dma.vmem_to_hbm [thread:$0]  %s292, 128, %s294, [#allocation4]
    $region49: #{tpu_custom_call.1} parent=1 // pred_fallthru
      _
    // Predicated region
    $region50: #{tpu_custom_call.1} parent=1 // pred_check
      _
    $region51: #{tpu_custom_call.1} parent=1 // pred_check_branch
      %298 = sbr.rel (0) target = $region53
    $region52: #{tpu_custom_call.1} parent=1 // pred_region
      %300 = dma.done [#allocation4], 128
    $region53: #{tpu_custom_call.1} parent=1 // pred_fallthru
      _
    %301 = vsyncpa [#allocation3], 1
    %302 = vsyncpa [#allocation6], 1
    %303 = vsyncpa [#allocation9], 1
    %304 = vsyncpa [#allocation4], 1

</llo_original>
